<compile_context>
chip_gen: v7x
topology: tpu7x:2x2x1
jax: 0.10.0
libtpu: 0.0.40
codegen_flags: <defaults>
</compile_context>

<pallas_src>
import jax
import jax.numpy as jnp
from jax.experimental import pallas as pl
from jax.experimental.pallas import tpu as pltpu

HIDDEN = 256
LOG_MIN = -2.0
LOG_MAX = 20.0
LANE = 128
SUBLANE = 8
TB_MAX = 1024      # batch-tile cap: fine in VMEM on all generations
MIN_SPLIT = 64     # below this many rows, one tile (splitting buys nothing)
BIG = 3.0e38       # finite "no clamp" sentinel (avoid inf constants in VMEM)


def _round_up(a, b):
    return ((a + b - 1) // b) * b


def _cdiv(a, b):
    return (a + b - 1) // b


def _choose_tb(B):
    """Balanced batch tile: multiple of 8; >=2 grid steps when B is large
    enough (keeps both v7x TensorCores busy); capped at TB_MAX for v5e/v6e
    serial grids; pad waste bounded to < one sublane group per tile."""
    b8 = _round_up(B, SUBLANE)
    if b8 <= MIN_SPLIT:
        return b8
    n_steps = max(2, _cdiv(b8, TB_MAX))
    return _round_up(_cdiv(b8, n_steps), SUBLANE)


# --------------------------------------------------------------------------
# Kernel: full MLP + fused (mean | log_std) head for one batch tile.
# --------------------------------------------------------------------------
def actor_kernel(x_ref, w1_ref, b1_ref, w2_ref, b2_ref, wh_ref, bh_ref,
                 lo_ref, hi_ref, out_ref):
    # Layer 1: Linear(n_state, 256) + ReLU   (f32 MXU, f32 accumulate)
    h = jnp.dot(x_ref[...], w1_ref[...], preferred_element_type=jnp.float32)
    h = jnp.maximum(h + b1_ref[...], 0.0)

    # Layer 2: Linear(256, 256) + ReLU
    h = jnp.dot(h, w2_ref[...], preferred_element_type=jnp.float32)
    h = jnp.maximum(h + b2_ref[...], 0.0)

    # Fused heads: one (256, head_pad) matmul, lane-dense output.
    out = jnp.dot(h, wh_ref[...], preferred_element_type=jnp.float32) + bh_ref[...]

    # Per-lane clamp: mean lanes see (-BIG, +BIG) (no-op),
    # log_std lanes see (LOG_MIN, LOG_MAX). Two broadcast VPU ops, no mask.
    out = jnp.minimum(jnp.maximum(out, lo_ref[...]), hi_ref[...])

    out_ref[...] = out


# --------------------------------------------------------------------------
# Parameter preparation: fuse + pad heads, build clamp-bound vectors (once).
# --------------------------------------------------------------------------
def prepare_params(p):
    action_dim = p["wm"].shape[1]
    head_pad = _round_up(2 * action_dim, LANE)

    wh = jnp.zeros((HIDDEN, head_pad), jnp.float32)
    wh = wh.at[:, :action_dim].set(p["wm"])
    wh = wh.at[:, action_dim:2 * action_dim].set(p["wls"])

    bh = jnp.zeros((1, head_pad), jnp.float32)
    bh = bh.at[:, :action_dim].set(p["bm"])
    bh = bh.at[:, action_dim:2 * action_dim].set(p["bls"])

    lo = jnp.full((1, head_pad), -BIG, jnp.float32)
    lo = lo.at[:, action_dim:2 * action_dim].set(LOG_MIN)
    hi = jnp.full((1, head_pad), BIG, jnp.float32)
    hi = hi.at[:, action_dim:2 * action_dim].set(LOG_MAX)

    return dict(
        w1=p["w1"].astype(jnp.float32), b1=p["b1"].astype(jnp.float32),
        w2=p["w2"].astype(jnp.float32), b2=p["b2"].astype(jnp.float32),
        wh=wh, bh=bh, lo=lo, hi=hi,
        action_dim=action_dim, head_pad=head_pad,
    )


# --------------------------------------------------------------------------
# Wrapper
# --------------------------------------------------------------------------
def actor_forward(x, prep, *, return_fused=False):
    """x: (B, n_state) float32. prep: output of prepare_params().

    Returns (mean, log_std); pass return_fused=True to get the fused padded
    (B, head_pad) buffer directly (mean in lanes [0,A), log_std in [A,2A)) and
    skip the two wrapper slice launches when the consumer can handle it.
    """
    B, n_state = x.shape
    A = prep["action_dim"]
    head_pad = prep["head_pad"]

    TB = _choose_tb(B)
    grid = (_cdiv(B, TB),)   # ragged last block: padded reads, masked writes

    flops = 2 * B * (n_state * HIDDEN + HIDDEN * HIDDEN + HIDDEN * head_pad)
    bytes_accessed = (
        x.size * 4
        + (prep["w1"].size + prep["w2"].size + prep["wh"].size) * 4
        + (prep["b1"].size + prep["b2"].size + prep["bh"].size) * 4
        + (prep["lo"].size + prep["hi"].size) * 4
        + B * head_pad * 4
    )

    fused = pl.pallas_call(
        actor_kernel,
        out_shape=jax.ShapeDtypeStruct((B, head_pad), jnp.float32),
        grid_spec=pltpu.PrefetchScalarGridSpec(
            num_scalar_prefetch=0,
            grid=grid,
            in_specs=[
                pl.BlockSpec((TB, n_state), lambda i: (i, 0)),        # x tile
                pl.BlockSpec((n_state, HIDDEN), lambda i: (0, 0)),    # w1 (resident)
                pl.BlockSpec((1, HIDDEN), lambda i: (0, 0)),          # b1
                pl.BlockSpec((HIDDEN, HIDDEN), lambda i: (0, 0)),     # w2 (resident)
                pl.BlockSpec((1, HIDDEN), lambda i: (0, 0)),          # b2
                pl.BlockSpec((HIDDEN, head_pad), lambda i: (0, 0)),   # fused head W
                pl.BlockSpec((1, head_pad), lambda i: (0, 0)),        # fused head b
                pl.BlockSpec((1, head_pad), lambda i: (0, 0)),        # clamp lower
                pl.BlockSpec((1, head_pad), lambda i: (0, 0)),        # clamp upper
            ],
            out_specs=pl.BlockSpec((TB, head_pad), lambda i: (i, 0)),
        ),
        compiler_params=pltpu.CompilerParams(
            dimension_semantics=("parallel",),
        ),
        cost_estimate=pl.CostEstimate(
            flops=flops, transcendentals=0, bytes_accessed=bytes_accessed),
    )(x, prep["w1"], prep["b1"], prep["w2"], prep["b2"],
      prep["wh"], prep["bh"], prep["lo"], prep["hi"])

    if return_fused:
        return fused
    mean = fused[:, :A]
    log_std = fused[:, A:2 * A]
    return mean, log_std


# --------------------------------------------------------------------------
# Init + reference
# --------------------------------------------------------------------------
def init_params(key, n_state, action_dim):
    """Deterministic init mimicking nn.Linear's U(-1/sqrt(fan_in), 1/sqrt(fan_in))."""
    ks = jax.random.split(key, 8)

    def linear(kw, kb, fan_in, fan_out):
        bound = 1.0 / jnp.sqrt(jnp.float32(fan_in))
        w = jax.random.uniform(kw, (fan_in, fan_out), jnp.float32, -bound, bound)
        b = jax.random.uniform(kb, (1, fan_out), jnp.float32, -bound, bound)
        return w, b

    w1, b1 = linear(ks[0], ks[1], n_state, HIDDEN)
    w2, b2 = linear(ks[2], ks[3], HIDDEN, HIDDEN)
    wm, bm = linear(ks[4], ks[5], HIDDEN, action_dim)
    wls, bls = linear(ks[6], ks[7], HIDDEN, action_dim)
    return dict(w1=w1, b1=b1, w2=w2, b2=b2, wm=wm, bm=bm, wls=wls, bls=bls)


def actor_reference_f32(x, p):
    """Pure-f32 PyTorch-equivalent reference."""
    hp = jax.lax.Precision.HIGHEST
    h = jnp.maximum(jnp.dot(x, p["w1"], precision=hp) + p["b1"], 0.0)
    h = jnp.maximum(jnp.dot(h, p["w2"], precision=hp) + p["b2"], 0.0)
    mean = jnp.dot(h, p["wm"], precision=hp) + p["bm"]
    log_std = jnp.clip(jnp.dot(h, p["wls"], precision=hp) + p["bls"],
                       LOG_MIN, LOG_MAX)
    return mean, log_std


if __name__ == "__main__":
    key = jax.random.PRNGKey(0)
    k_param, k_x = jax.random.split(key)

    batch = 6                 # intentionally not a multiple of 8: ragged tile
    n_state = 32
    action_dim = 8
    action_limit = 1.0        # not used in forward(); kept for API parity  # noqa: F841

    raw_params = init_params(k_param, n_state, action_dim)
    prep = prepare_params(raw_params)
    x = jax.random.normal(k_x, (batch, n_state), jnp.float32)

    mean, log_std = actor_forward(x, prep)
    jax.block_until_ready((mean, log_std))

    assert mean.shape == (batch, action_dim)
    assert log_std.shape == (batch, action_dim)

    # Semantic check vs full-f32 PyTorch-equivalent reference (kernel now runs
    # f32 end-to-end, so parity is tight).
    mean_f, log_std_f = actor_reference_f32(x, raw_params)
    assert jnp.allclose(mean, mean_f, atol=5e-3, rtol=5e-3)
    assert jnp.allclose(log_std, log_std_f, atol=5e-3, rtol=5e-3)

    assert jnp.all(log_std >= LOG_MIN) and jnp.all(log_std <= LOG_MAX)

    print("KERNEL_OK")
</pallas_src>

<mosaic_0001>
module attributes {stable_mosaic.version = 11 : i64} {
  func.func @actor_kernel(%arg0: i32, %arg1: memref<8x32xf32, #tpu.memory_space<vmem>>, %arg2: memref<32x256xf32, #tpu.memory_space<vmem>>, %arg3: memref<1x256xf32, #tpu.memory_space<vmem>>, %arg4: memref<256x256xf32, #tpu.memory_space<vmem>>, %arg5: memref<1x256xf32, #tpu.memory_space<vmem>>, %arg6: memref<256x128xf32, #tpu.memory_space<vmem>>, %arg7: memref<1x128xf32, #tpu.memory_space<vmem>>, %arg8: memref<1x128xf32, #tpu.memory_space<vmem>>, %arg9: memref<1x128xf32, #tpu.memory_space<vmem>>, %arg10: memref<8x128xf32, #tpu.memory_space<vmem>>) attributes {dimension_semantics = [#tpu.dimension_semantics<parallel>], iteration_bounds = array<i64: 1>, scalar_prefetch = 0 : i64, scratch_operands = 0 : i64, tpu.core_type = #tpu.core_type<tc>, window_params = [{transform_indices = @transform_0, window_bounds = array<i64: 8, 32>}, {pipeline_mode = #tpu.pipeline_mode<synchronous>, transform_indices = @transform_1, window_bounds = array<i64: 32, 256>}, {pipeline_mode = #tpu.pipeline_mode<synchronous>, transform_indices = @transform_2, window_bounds = array<i64: 1, 256>}, {pipeline_mode = #tpu.pipeline_mode<synchronous>, transform_indices = @transform_3, window_bounds = array<i64: 256, 256>}, {pipeline_mode = #tpu.pipeline_mode<synchronous>, transform_indices = @transform_4, window_bounds = array<i64: 1, 256>}, {pipeline_mode = #tpu.pipeline_mode<synchronous>, transform_indices = @transform_5, window_bounds = array<i64: 256, 128>}, {pipeline_mode = #tpu.pipeline_mode<synchronous>, transform_indices = @transform_6, window_bounds = array<i64: 1, 128>}, {pipeline_mode = #tpu.pipeline_mode<synchronous>, transform_indices = @transform_7, window_bounds = array<i64: 1, 128>}, {pipeline_mode = #tpu.pipeline_mode<synchronous>, transform_indices = @transform_8, window_bounds = array<i64: 1, 128>}, {transform_indices = @transform_9, window_bounds = array<i64: 8, 128>}]} {
    %c0 = arith.constant 0 : index
    %c0_0 = arith.constant 0 : index
    %0 = vector.load %arg1[%c0, %c0_0] : memref<8x32xf32, #tpu.memory_space<vmem>>, vector<8x32xf32>
    %c0_1 = arith.constant 0 : index
    %c0_2 = arith.constant 0 : index
    %1 = vector.load %arg2[%c0_1, %c0_2] : memref<32x256xf32, #tpu.memory_space<vmem>>, vector<32x256xf32>
    %cst = arith.constant dense<0.000000e+00> : vector<8x256xf32>
    %2 = tpu.matmul %0, %1, %cst {dimension_numbers = #tpu.dot_dimension_numbers<[1], [0], [0], [1], [0, 0, 1, 1], [], []>} : vector<8x32xf32>, vector<32x256xf32>, vector<8x256xf32> -> vector<8x256xf32>
    %c0_3 = arith.constant 0 : index
    %c0_4 = arith.constant 0 : index
    %3 = vector.load %arg3[%c0_3, %c0_4] : memref<1x256xf32, #tpu.memory_space<vmem>>, vector<1x256xf32>
    %4 = vector.broadcast %3 : vector<1x256xf32> to vector<8x256xf32>
    %5 = arith.addf %2, %4 : vector<8x256xf32>
    %cst_5 = arith.constant 0.000000e+00 : f32
    %6 = vector.broadcast %cst_5 : f32 to vector<8x256xf32>
    %7 = arith.maximumf %5, %6 : vector<8x256xf32>
    %c0_6 = arith.constant 0 : index
    %c0_7 = arith.constant 0 : index
    %8 = vector.load %arg4[%c0_6, %c0_7] : memref<256x256xf32, #tpu.memory_space<vmem>>, vector<256x256xf32>
    %cst_8 = arith.constant dense<0.000000e+00> : vector<8x256xf32>
    %9 = tpu.matmul %7, %8, %cst_8 {dimension_numbers = #tpu.dot_dimension_numbers<[1], [0], [0], [1], [0, 0, 1, 1], [], []>} : vector<8x256xf32>, vector<256x256xf32>, vector<8x256xf32> -> vector<8x256xf32>
    %c0_9 = arith.constant 0 : index
    %c0_10 = arith.constant 0 : index
    %10 = vector.load %arg5[%c0_9, %c0_10] : memref<1x256xf32, #tpu.memory_space<vmem>>, vector<1x256xf32>
    %11 = vector.broadcast %10 : vector<1x256xf32> to vector<8x256xf32>
    %12 = arith.addf %9, %11 : vector<8x256xf32>
    %cst_11 = arith.constant 0.000000e+00 : f32
    %13 = vector.broadcast %cst_11 : f32 to vector<8x256xf32>
    %14 = arith.maximumf %12, %13 : vector<8x256xf32>
    %c0_12 = arith.constant 0 : index
    %c0_13 = arith.constant 0 : index
    %15 = vector.load %arg6[%c0_12, %c0_13] : memref<256x128xf32, #tpu.memory_space<vmem>>, vector<256x128xf32>
    %cst_14 = arith.constant dense<0.000000e+00> : vector<8x128xf32>
    %16 = tpu.matmul %14, %15, %cst_14 {dimension_numbers = #tpu.dot_dimension_numbers<[1], [0], [0], [1], [0, 0, 1, 1], [], []>} : vector<8x256xf32>, vector<256x128xf32>, vector<8x128xf32> -> vector<8x128xf32>
    %c0_15 = arith.constant 0 : index
    %c0_16 = arith.constant 0 : index
    %17 = vector.load %arg7[%c0_15, %c0_16] : memref<1x128xf32, #tpu.memory_space<vmem>>, vector<1x128xf32>
    %18 = vector.broadcast %17 : vector<1x128xf32> to vector<8x128xf32>
    %19 = arith.addf %16, %18 : vector<8x128xf32>
    %c0_17 = arith.constant 0 : index
    %c0_18 = arith.constant 0 : index
    %20 = vector.load %arg8[%c0_17, %c0_18] : memref<1x128xf32, #tpu.memory_space<vmem>>, vector<1x128xf32>
    %21 = vector.broadcast %20 : vector<1x128xf32> to vector<8x128xf32>
    %22 = arith.maximumf %19, %21 : vector<8x128xf32>
    %c0_19 = arith.constant 0 : index
    %c0_20 = arith.constant 0 : index
    %23 = vector.load %arg9[%c0_19, %c0_20] : memref<1x128xf32, #tpu.memory_space<vmem>>, vector<1x128xf32>
    %24 = vector.broadcast %23 : vector<1x128xf32> to vector<8x128xf32>
    %25 = arith.minimumf %22, %24 : vector<8x128xf32>
    %c0_21 = arith.constant 0 : index
    %c0_22 = arith.constant 0 : index
    %26 = vector.load %arg10[%c0_21, %c0_22] : memref<8x128xf32, #tpu.memory_space<vmem>>, vector<8x128xf32>
    tpu.vector_store %arg10[%c0_21, %c0_22], %25 {strides = array<i32>} : memref<8x128xf32, #tpu.memory_space<vmem>>, vector<8x128xf32>,
    return
  }
  func.func @transform_0(%arg0: i32) -> (i32, i32) {
    %c0_i32 = arith.constant 0 : i32
    %c0_i32_0 = arith.constant 0 : i32
    return %arg0, %c0_i32 : i32, i32
  }
  func.func @transform_1(%arg0: i32) -> (i32, i32) {
    %c0_i32 = arith.constant 0 : i32
    %c0_i32_0 = arith.constant 0 : i32
    %c0_i32_1 = arith.constant 0 : i32
    return %c0_i32, %c0_i32_0 : i32, i32
  }
  func.func @transform_2(%arg0: i32) -> (i32, i32) {
    %c0_i32 = arith.constant 0 : i32
    %c0_i32_0 = arith.constant 0 : i32
    %c0_i32_1 = arith.constant 0 : i32
    return %c0_i32, %c0_i32_0 : i32, i32
  }
  func.func @transform_3(%arg0: i32) -> (i32, i32) {
    %c0_i32 = arith.constant 0 : i32
    %c0_i32_0 = arith.constant 0 : i32
    %c0_i32_1 = arith.constant 0 : i32
    return %c0_i32, %c0_i32_0 : i32, i32
  }
  func.func @transform_4(%arg0: i32) -> (i32, i32) {
    %c0_i32 = arith.constant 0 : i32
    %c0_i32_0 = arith.constant 0 : i32
    %c0_i32_1 = arith.constant 0 : i32
    return %c0_i32, %c0_i32_0 : i32, i32
  }
  func.func @transform_5(%arg0: i32) -> (i32, i32) {
    %c0_i32 = arith.constant 0 : i32
    %c0_i32_0 = arith.constant 0 : i32
    %c0_i32_1 = arith.constant 0 : i32
    return %c0_i32, %c0_i32_0 : i32, i32
  }
  func.func @transform_6(%arg0: i32) -> (i32, i32) {
    %c0_i32 = arith.constant 0 : i32
    %c0_i32_0 = arith.constant 0 : i32
    %c0_i32_1 = arith.constant 0 : i32
    return %c0_i32, %c0_i32_0 : i32, i32
  }
  func.func @transform_7(%arg0: i32) -> (i32, i32) {
    %c0_i32 = arith.constant 0 : i32
    %c0_i32_0 = arith.constant 0 : i32
    %c0_i32_1 = arith.constant 0 : i32
    return %c0_i32, %c0_i32_0 : i32, i32
  }
  func.func @transform_8(%arg0: i32) -> (i32, i32) {
    %c0_i32 = arith.constant 0 : i32
    %c0_i32_0 = arith.constant 0 : i32
    %c0_i32_1 = arith.constant 0 : i32
    return %c0_i32, %c0_i32_0 : i32, i32
  }
  func.func @transform_9(%arg0: i32) -> (i32, i32) {
    %c0_i32 = arith.constant 0 : i32
    %c0_i32_0 = arith.constant 0 : i32
    return %arg0, %c0_i32 : i32, i32
  }
}

</mosaic_0001>

<llo_original>
// kernel: tpu_custom_call.1
$region0: #{tpu_custom_call.1}
  #allocation0 [shape = 'u32[]', space=smem, size = 0x4, offset = 0x4, fixed_abs, tag = 'smem constant byte address 0x4 - core index']
  #allocation1 [shape = 'u32[144,128]{1,0:T(1,128)}', space=vmem, size = 0x12000, scoped, tag = 'internal scratch']
  %s0 = inlined_call_operand.hbm [shape: f32[6,32], index: 0, kind: input, shape index: {}]
  %s1 = inlined_call_operand.hbm [shape: f32[32,256], index: 1, kind: input, shape index: {}]
  %s2 = inlined_call_operand.vmem [shape: f32[1,256], index: 2, kind: input, shape index: {}]
  %s3 = inlined_call_operand.hbm [shape: f32[256,256], index: 3, kind: input, shape index: {}]
  %s4 = inlined_call_operand.vmem [shape: f32[1,256], index: 4, kind: input, shape index: {}]
  %s5 = inlined_call_operand.hbm [shape: f32[256,128], index: 5, kind: input, shape index: {}]
  %s6 = inlined_call_operand.vmem [shape: f32[1,128], index: 6, kind: input, shape index: {}]
  %s7 = inlined_call_operand.vmem [shape: f32[1,128], index: 7, kind: input, shape index: {}]
  %s8 = inlined_call_operand.vmem [shape: f32[1,128], index: 8, kind: input, shape index: {}]
  %s9 = inlined_call_operand.hbm [shape: f32[6,128], index: 9, kind: output, shape index: {}]
  %s10 = sld [smem:[#allocation0]]
  $region62: #{tpu_custom_call.1} parent=0
    _
  %s12 = ssub.s32 1, %s10
  %s13 = scalar_select 0, %s12, %s10
  $region1: #{tpu_custom_call.1} parent=0
    #allocation2 [shape = 'u8[4096]{0}', space=vmem, size = 0x1000, scoped, tag = 'input window, operand 0, single buffered']
    #allocation3 [shape = 's32[1]{0}', space=sflag, size = 0x4, scoped, tag = 'scoped memory for tpu_custom_call.1']
    #allocation4 [shape = 's32[1]{0}', space=sflag, size = 0x4, scoped, tag = 'scoped memory for tpu_custom_call.1']
    #allocation5 [shape = 'u8[32768]{0}', space=vmem, size = 0x8000, scoped, tag = 'input window, operand 1, single buffered']
    #allocation6 [shape = 's32[1]{0}', space=sflag, size = 0x4, scoped, tag = 'scoped memory for tpu_custom_call.1']
    #allocation7 [shape = 'u8[262144]{0}', space=vmem, size = 0x40000, scoped, tag = 'input window, operand 3, single buffered']
    #allocation8 [shape = 'u8[131072]{0}', space=vmem, size = 0x20000, scoped, tag = 'input window, operand 5, single buffered']
    #allocation9 [shape = 's32[1]{0}', space=sflag, size = 0x4, scoped, tag = 'scoped memory for tpu_custom_call.1']
    #allocation10 [shape = 'u8[4096]{0}', space=vmem, size = 0x1000, scoped, tag = 'output window, operand 0, single buffered']
    %14 = vsyncpa [#allocation3], 0
    %15 = vsyncpa [#allocation6], 0
    %16 = vsyncpa [#allocation9], 0
    %17 = vsyncpa [#allocation4], 0
    // Predicated region
    $region2: #{tpu_custom_call.1} parent=1 // pred_check
      _
    $region3: #{tpu_custom_call.1} parent=1 // pred_check_branch
      %19 = sbr.rel (0) target = $region5
    $region4: #{tpu_custom_call.1} parent=1 // pred_region
      %s21 = ssub.s32 128, 128
      %22 = vsyncadd [#allocation3], %s21
      %s24 = sshll.u32 [#allocation2], 4
      %s25 = int_to_ptr.vmem [resolvable:$true] %s24
      %27 = dma.hbm_to_vmem [thread:$0]  %s0, 128, %s25, [#allocation3]
    $region5: #{tpu_custom_call.1} parent=1 // pred_fallthru
      _
    // Predicated region
    $region6: #{tpu_custom_call.1} parent=1 // pred_check
      _
    $region7: #{tpu_custom_call.1} parent=1 // pred_check_branch
      %29 = sbr.rel (0) target = $region9
    $region8: #{tpu_custom_call.1} parent=1 // pred_region
      %s31 = ssub.s32 1024, 1024
      %32 = vsyncadd [#allocation6], %s31
      %s33 = sshll.u32 [#allocation5], 4
      %s34 = int_to_ptr.vmem [resolvable:$true] %s33
      %39 = dma.hbm_to_vmem [thread:$0]  %s1, 1024, %s34, [#allocation6], 256, 256, 16
    $region9: #{tpu_custom_call.1} parent=1 // pred_fallthru
      _
    // Predicated region
    $region10: #{tpu_custom_call.1} parent=1 // pred_check
      _
    $region11: #{tpu_custom_call.1} parent=1 // pred_check_branch
      %41 = sbr.rel (0) target = $region13
    $region12: #{tpu_custom_call.1} parent=1 // pred_region
      _
    $region13: #{tpu_custom_call.1} parent=1 // pred_fallthru
      _
    // Predicated region
    $region14: #{tpu_custom_call.1} parent=1 // pred_check
      _
    $region15: #{tpu_custom_call.1} parent=1 // pred_check_branch
      %43 = sbr.rel (0) target = $region17
    $region16: #{tpu_custom_call.1} parent=1 // pred_region
      %s45 = ssub.s32 8192, 8192
      %46 = vsyncadd [#allocation6], %s45
      %s47 = sshll.u32 [#allocation7], 4
      %s48 = int_to_ptr.vmem [resolvable:$true] %s47
      %53 = dma.hbm_to_vmem [thread:$0]  %s3, 8192, %s48, [#allocation6], 256, 256, 16
    $region17: #{tpu_custom_call.1} parent=1 // pred_fallthru
      _
    // Predicated region
    $region18: #{tpu_custom_call.1} parent=1 // pred_check
      _
    $region19: #{tpu_custom_call.1} parent=1 // pred_check_branch
      %55 = sbr.rel (0) target = $region21
    $region20: #{tpu_custom_call.1} parent=1 // pred_region
      _
    $region21: #{tpu_custom_call.1} parent=1 // pred_fallthru
      _
    // Predicated region
    $region22: #{tpu_custom_call.1} parent=1 // pred_check
      _
    $region23: #{tpu_custom_call.1} parent=1 // pred_check_branch
      %57 = sbr.rel (0) target = $region25
    $region24: #{tpu_custom_call.1} parent=1 // pred_region
      %s59 = ssub.s32 4096, 4096
      %60 = vsyncadd [#allocation9], %s59
      %s61 = sshll.u32 [#allocation8], 4
      %s62 = int_to_ptr.vmem [resolvable:$true] %s61
      %67 = dma.hbm_to_vmem [thread:$0]  %s5, 4096, %s62, [#allocation9], 128, 128, 8
    $region25: #{tpu_custom_call.1} parent=1 // pred_fallthru
      _
    // Predicated region
    $region26: #{tpu_custom_call.1} parent=1 // pred_check
      _
    $region27: #{tpu_custom_call.1} parent=1 // pred_check_branch
      %69 = sbr.rel (0) target = $region29
    $region28: #{tpu_custom_call.1} parent=1 // pred_region
      _
    $region29: #{tpu_custom_call.1} parent=1 // pred_fallthru
      _
    // Predicated region
    $region30: #{tpu_custom_call.1} parent=1 // pred_check
      _
    $region31: #{tpu_custom_call.1} parent=1 // pred_check_branch
      %71 = sbr.rel (0) target = $region33
    $region32: #{tpu_custom_call.1} parent=1 // pred_region
      _
    $region33: #{tpu_custom_call.1} parent=1 // pred_fallthru
      _
    // Predicated region
    $region34: #{tpu_custom_call.1} parent=1 // pred_check
      _
    $region35: #{tpu_custom_call.1} parent=1 // pred_check_branch
      %73 = sbr.rel (0) target = $region37
    $region36: #{tpu_custom_call.1} parent=1 // pred_region
      _
    $region37: #{tpu_custom_call.1} parent=1 // pred_fallthru
      _
    // Predicated region
    $region38: #{tpu_custom_call.1} parent=1 // pred_check
      _
    $region39: #{tpu_custom_call.1} parent=1 // pred_check_branch
      %75 = sbr.rel (0) target = $region41
    $region40: #{tpu_custom_call.1} parent=1 // pred_region
      %76 = dma.done [#allocation3], 128
    $region41: #{tpu_custom_call.1} parent=1 // pred_fallthru
      _
    // Predicated region
    $region42: #{tpu_custom_call.1} parent=1 // pred_check
      _
    $region43: #{tpu_custom_call.1} parent=1 // pred_check_branch
      %78 = sbr.rel (0) target = $region45
    $region44: #{tpu_custom_call.1} parent=1 // pred_region
      %79 = dma.done [#allocation6], 1024
    $region45: #{tpu_custom_call.1} parent=1 // pred_fallthru
      _
    // Predicated region
    $region46: #{tpu_custom_call.1} parent=1 // pred_check
      _
    $region47: #{tpu_custom_call.1} parent=1 // pred_check_branch
      %81 = sbr.rel (0) target = $region49
    $region48: #{tpu_custom_call.1} parent=1 // pred_region
      %82 = dma.done [#allocation6], 8192
    $region49: #{tpu_custom_call.1} parent=1 // pred_fallthru
      _
    // Predicated region
    $region50: #{tpu_custom_call.1} parent=1 // pred_check
      _
    $region51: #{tpu_custom_call.1} parent=1 // pred_check_branch
      %84 = sbr.rel (0) target = $region53
    $region52: #{tpu_custom_call.1} parent=1 // pred_region
      %85 = dma.done [#allocation9], 4096
    $region53: #{tpu_custom_call.1} parent=1 // pred_fallthru
      _
    %v86 = vld [vmem:[#allocation2] sm:$0xff]
    %v87 = vld [vmem:[#allocation5] sm:$0xff]
    %v88 = vld [vmem:[#allocation5 + $0x8] sm:$0xff]
    %v89 = vld [vmem:[#allocation5 + $0x10] sm:$0xff]
    %v90 = vld [vmem:[#allocation5 + $0x18] sm:$0xff]
    %v91 = vld [vmem:[#allocation5 + $0x20] sm:$0xff]
    %v92 = vld [vmem:[#allocation5 + $0x28] sm:$0xff]
    %v93 = vld [vmem:[#allocation5 + $0x30] sm:$0xff]
    %v94 = vld [vmem:[#allocation5 + $0x38] sm:$0xff]
    %v95 = vld [vmem:[%s2] sm:$0x3]
    %v97 = vlaneseq
    %v98 = vshrl.u32 %v97, 7
    %v99 = vsub.s32 0, %v98
    %v100 = vrot.slane %v95, %v99
    %v101 = vlaneseq
    %v102 = vshrl.u32 %v101, 7
    %v103 = vsub.s32 1, %v102
    %v104 = vrot.slane %v95, %v103
    %vm107 = vcmask 261120
    %v109 = vsel %vm107, %v86, 0
    %111 = vmatprep.subr.mxu0 %v88
    %112 = vmatpush1.msra.mxu0 %v87
    %113 = vmatprep.subr.mxu0 %v90
    %114 = vmatpush1.msra.mxu0 %v89
    %115 = vmatprep.subr.mxu0 %v92
    %116 = vmatpush1.msra.mxu0 %v91
    %117 = vmatprep.subr.mxu0 %v94
    %118 = vmatpush1.msra.mxu0 %v93
    %119 = vmatprep.subr.mxu0 0.0
    %120 = vmatpush1.msra.mxu0 0.0
    %121 = vmatprep.subr.mxu0 0.0
    %122 = vmatpush1.msra.mxu0 0.0
    %123 = vmatprep.subr.mxu0 0.0
    %124 = vmatpush1.msra.mxu0 0.0
    %125 = vmatprep.subr.mxu0 0.0
    %126 = vmatpush1.msra.mxu0 0.0
    %127 = vmatprep.subr.mxu0 0.0
    %128 = vmatpush1.msra.mxu0 0.0
    %129 = vmatprep.subr.mxu0 0.0
    %130 = vmatpush1.msra.mxu0 0.0
    %131 = vmatprep.subr.mxu0 0.0
    %132 = vmatpush1.msra.mxu0 0.0
    %133 = vmatprep.subr.mxu0 0.0
    %134 = vmatpush1.msra.mxu0 0.0
    %135 = vmatprep.subr.mxu0 0.0
    %136 = vmatpush1.msra.mxu0 0.0
    %137 = vmatprep.subr.mxu0 0.0
    %138 = vmatpush1.msra.mxu0 0.0
    %139 = vmatprep.subr.mxu0 0.0
    %140 = vmatpush1.msra.mxu0 0.0
    %141 = vmatprep.subr.mxu0 0.0
    %142 = vmatpush1.msra.mxu0 0.0
    %143 = vmatprep.subr.mxu0 0.0
    %144 = vmatpush1.msra.mxu0 0.0
    %145 = vmatprep.subr.mxu0 0.0
    %146 = vmatpush1.msra.mxu0 0.0
    %147 = vmatprep.subr.mxu0 0.0
    %148 = vmatpush1.msra.mxu0 0.0
    %149 = vmatprep.subr.mxu0 0.0
    %150 = vmatpush1.msra.mxu0 0.0
    %151 = vmatprep.subr.mxu0 0.0
    %152 = vmatpush1.msra.mxu0 0.0
    %153 = vmatprep.subr.mxu0 0.0
    %154 = vmatpush1.msra.mxu0 0.0
    %155 = vmatprep.subr.mxu0 0.0
    %156 = vmatpush1.msra.mxu0 0.0
    %157 = vmatprep.subr.mxu0 0.0
    %158 = vmatpush1.msra.mxu0 0.0
    %159 = vmatprep.subr.mxu0 0.0
    %160 = vmatpush1.msra.mxu0 0.0
    %161 = vmatprep.subr.mxu0 0.0
    %162 = vmatpush1.msra.mxu0 0.0
    %163 = vmatprep.subr.mxu0 0.0
    %164 = vmatpush1.msra.mxu0 0.0
    %165 = vmatprep.subr.mxu0 0.0
    %166 = vmatpush1.msra.mxu0 0.0
    %167 = vmatprep.subr.mxu0 0.0
    %168 = vmatpush1.msra.mxu0 0.0
    %169 = vmatprep.subr.mxu0 0.0
    %170 = vmatpush1.msra.mxu0 0.0
    %171 = vmatprep.subr.mxu0 0.0
    %172 = vmatpush1.msra.mxu0 0.0
    %173 = vmatprep.subr.mxu0 0.0
    %174 = vmatpush1.msra.mxu0 0.0
    %175 = vmatprep.mubr.f32.mxu0 0.0
    %176 = vmatmul.mubr.f32.gmra.mrb[0].mxu0 %v109
    %v177 = vpop.f32.mrb[0].mxu0
    %v178 = vadd.f32 %v100, %v177
    %v179 = vpop.f32.mrb[0].mxu0
    %v180 = vadd.f32 %v104, %v179
    %181 = vdwg.mxu0
    %v182 = vmax.f32 %v178, 0.0
    %v183 = vmax.f32 %v180, 0.0
    %v184 = vld [vmem:[#allocation7] sm:$0xff]
    %v185 = vld [vmem:[#allocation7 + $0x8] sm:$0xff]
    %v186 = vld [vmem:[#allocation7 + $0x10] sm:$0xff]
    %v187 = vld [vmem:[#allocation7 + $0x18] sm:$0xff]
    %v188 = vld [vmem:[#allocation7 + $0x20] sm:$0xff]
    %v189 = vld [vmem:[#allocation7 + $0x28] sm:$0xff]
    %v190 = vld [vmem:[#allocation7 + $0x30] sm:$0xff]
    %v191 = vld [vmem:[#allocation7 + $0x38] sm:$0xff]
    %v192 = vld [vmem:[#allocation7 + $0x40] sm:$0xff]
    %v193 = vld [vmem:[#allocation7 + $0x48] sm:$0xff]
    %v194 = vld [vmem:[#allocation7 + $0x50] sm:$0xff]
    %v195 = vld [vmem:[#allocation7 + $0x58] sm:$0xff]
    %v196 = vld [vmem:[#allocation7 + $0x60] sm:$0xff]
    %v197 = vld [vmem:[#allocation7 + $0x68] sm:$0xff]
    %v198 = vld [vmem:[#allocation7 + $0x70] sm:$0xff]
    %v199 = vld [vmem:[#allocation7 + $0x78] sm:$0xff]
    %v200 = vld [vmem:[#allocation7 + $0x80] sm:$0xff]
    %v201 = vld [vmem:[#allocation7 + $0x88] sm:$0xff]
    %v202 = vld [vmem:[#allocation7 + $0x90] sm:$0xff]
    %v203 = vld [vmem:[#allocation7 + $0x98] sm:$0xff]
    %v204 = vld [vmem:[#allocation7 + $0xa0] sm:$0xff]
    %v205 = vld [vmem:[#allocation7 + $0xa8] sm:$0xff]
    %v206 = vld [vmem:[#allocation7 + $0xb0] sm:$0xff]
    %v207 = vld [vmem:[#allocation7 + $0xb8] sm:$0xff]
    %v208 = vld [vmem:[#allocation7 + $0xc0] sm:$0xff]
    %v209 = vld [vmem:[#allocation7 + $0xc8] sm:$0xff]
    %v210 = vld [vmem:[#allocation7 + $0xd0] sm:$0xff]
    %v211 = vld [vmem:[#allocation7 + $0xd8] sm:$0xff]
    %v212 = vld [vmem:[#allocation7 + $0xe0] sm:$0xff]
    %v213 = vld [vmem:[#allocation7 + $0xe8] sm:$0xff]
    %v214 = vld [vmem:[#allocation7 + $0xf0] sm:$0xff]
    %v215 = vld [vmem:[#allocation7 + $0xf8] sm:$0xff]
    %v216 = vld [vmem:[#allocation7 + $0x100] sm:$0xff]
    %v217 = vld [vmem:[#allocation7 + $0x108] sm:$0xff]
    %v218 = vld [vmem:[#allocation7 + $0x110] sm:$0xff]
    %v219 = vld [vmem:[#allocation7 + $0x118] sm:$0xff]
    %v220 = vld [vmem:[#allocation7 + $0x120] sm:$0xff]
    %v221 = vld [vmem:[#allocation7 + $0x128] sm:$0xff]
    %v222 = vld [vmem:[#allocation7 + $0x130] sm:$0xff]
    %v223 = vld [vmem:[#allocation7 + $0x138] sm:$0xff]
    %v224 = vld [vmem:[#allocation7 + $0x140] sm:$0xff]
    %v225 = vld [vmem:[#allocation7 + $0x148] sm:$0xff]
    %v226 = vld [vmem:[#allocation7 + $0x150] sm:$0xff]
    %v227 = vld [vmem:[#allocation7 + $0x158] sm:$0xff]
    %v228 = vld [vmem:[#allocation7 + $0x160] sm:$0xff]
    %v229 = vld [vmem:[#allocation7 + $0x168] sm:$0xff]
    %v230 = vld [vmem:[#allocation7 + $0x170] sm:$0xff]
    %v231 = vld [vmem:[#allocation7 + $0x178] sm:$0xff]
    %v232 = vld [vmem:[#allocation7 + $0x180] sm:$0xff]
    %v233 = vld [vmem:[#allocation7 + $0x188] sm:$0xff]
    %v234 = vld [vmem:[#allocation7 + $0x190] sm:$0xff]
    %v235 = vld [vmem:[#allocation7 + $0x198] sm:$0xff]
    %v236 = vld [vmem:[#allocation7 + $0x1a0] sm:$0xff]
    %v237 = vld [vmem:[#allocation7 + $0x1a8] sm:$0xff]
    %v238 = vld [vmem:[#allocation7 + $0x1b0] sm:$0xff]
    %v239 = vld [vmem:[#allocation7 + $0x1b8] sm:$0xff]
    %v240 = vld [vmem:[#allocation7 + $0x1c0] sm:$0xff]
    %v241 = vld [vmem:[#allocation7 + $0x1c8] sm:$0xff]
    %v242 = vld [vmem:[#allocation7 + $0x1d0] sm:$0xff]
    %v243 = vld [vmem:[#allocation7 + $0x1d8] sm:$0xff]
    %v244 = vld [vmem:[#allocation7 + $0x1e0] sm:$0xff]
    %v245 = vld [vmem:[#allocation7 + $0x1e8] sm:$0xff]
    %v246 = vld [vmem:[#allocation7 + $0x1f0] sm:$0xff]
    %v247 = vld [vmem:[#allocation7 + $0x1f8] sm:$0xff]
    %v248 = vld [vmem:[%s4] sm:$0x3]
    %v250 = vlaneseq
    %v251 = vshrl.u32 %v250, 7
    %v252 = vsub.s32 0, %v251
    %v253 = vrot.slane %v248, %v252
    %v254 = vlaneseq
    %v255 = vshrl.u32 %v254, 7
    %v256 = vsub.s32 1, %v255
    %v257 = vrot.slane %v248, %v256
    %260 = vmatprep.subr.mxu0 %v185
    %261 = vmatpush1.msra.mxu0 %v184
    %262 = vmatprep.subr.mxu0 %v187
    %263 = vmatpush1.msra.mxu0 %v186
    %264 = vmatprep.subr.mxu0 %v189
    %265 = vmatpush1.msra.mxu0 %v188
    %266 = vmatprep.subr.mxu0 %v191
    %267 = vmatpush1.msra.mxu0 %v190
    %268 = vmatprep.subr.mxu0 %v193
    %269 = vmatpush1.msra.mxu0 %v192
    %270 = vmatprep.subr.mxu0 %v195
    %271 = vmatpush1.msra.mxu0 %v194
    %272 = vmatprep.subr.mxu0 %v197
    %273 = vmatpush1.msra.mxu0 %v196
    %274 = vmatprep.subr.mxu0 %v199
    %275 = vmatpush1.msra.mxu0 %v198
    %276 = vmatprep.subr.mxu0 %v201
    %277 = vmatpush1.msra.mxu0 %v200
    %278 = vmatprep.subr.mxu0 %v203
    %279 = vmatpush1.msra.mxu0 %v202
    %280 = vmatprep.subr.mxu0 %v205
    %281 = vmatpush1.msra.mxu0 %v204
    %282 = vmatprep.subr.mxu0 %v207
    %283 = vmatpush1.msra.mxu0 %v206
    %284 = vmatprep.subr.mxu0 %v209
    %285 = vmatpush1.msra.mxu0 %v208
    %286 = vmatprep.subr.mxu0 %v211
    %287 = vmatpush1.msra.mxu0 %v210
    %288 = vmatprep.subr.mxu0 %v213
    %289 = vmatpush1.msra.mxu0 %v212
    %290 = vmatprep.subr.mxu0 %v215
    %291 = vmatpush1.msra.mxu0 %v214
    %292 = vmatprep.subr.mxu0 %v217
    %293 = vmatpush1.msra.mxu0 %v216
    %294 = vmatprep.subr.mxu0 %v219
    %295 = vmatpush1.msra.mxu0 %v218
    %296 = vmatprep.subr.mxu0 %v221
    %297 = vmatpush1.msra.mxu0 %v220
    %298 = vmatprep.subr.mxu0 %v223
    %299 = vmatpush1.msra.mxu0 %v222
    %300 = vmatprep.subr.mxu0 %v225
    %301 = vmatpush1.msra.mxu0 %v224
    %302 = vmatprep.subr.mxu0 %v227
    %303 = vmatpush1.msra.mxu0 %v226
    %304 = vmatprep.subr.mxu0 %v229
    %305 = vmatpush1.msra.mxu0 %v228
    %306 = vmatprep.subr.mxu0 %v231
    %307 = vmatpush1.msra.mxu0 %v230
    %308 = vmatprep.subr.mxu0 %v233
    %309 = vmatpush1.msra.mxu0 %v232
    %310 = vmatprep.subr.mxu0 %v235
    %311 = vmatpush1.msra.mxu0 %v234
    %312 = vmatprep.subr.mxu0 %v237
    %313 = vmatpush1.msra.mxu0 %v236
    %314 = vmatprep.subr.mxu0 %v239
    %315 = vmatpush1.msra.mxu0 %v238
    %316 = vmatprep.subr.mxu0 %v241
    %317 = vmatpush1.msra.mxu0 %v240
    %318 = vmatprep.subr.mxu0 %v243
    %319 = vmatpush1.msra.mxu0 %v242
    %320 = vmatprep.subr.mxu0 %v245
    %321 = vmatpush1.msra.mxu0 %v244
    %322 = vmatprep.subr.mxu0 %v247
    %323 = vmatpush1.msra.mxu0 %v246
    %324 = vmatprep.mubr.f32.mxu0 %v183
    %325 = vmatmul.mubr.f32.gmra.mrb[0].mxu0 %v182
    %v326 = vpop.f32.mrb[0].mxu0
    %v327 = vadd.f32 %v253, %v326
    %v328 = vpop.f32.mrb[0].mxu0
    %v329 = vadd.f32 %v257, %v328
    %330 = vdwg.mxu0
    %v331 = vmax.f32 %v327, 0.0
    %v332 = vmax.f32 %v329, 0.0
    %v333 = vld [vmem:[#allocation8] sm:$0xff]
    %v334 = vld [vmem:[#allocation8 + $0x8] sm:$0xff]
    %v335 = vld [vmem:[#allocation8 + $0x10] sm:$0xff]
    %v336 = vld [vmem:[#allocation8 + $0x18] sm:$0xff]
    %v337 = vld [vmem:[#allocation8 + $0x20] sm:$0xff]
    %v338 = vld [vmem:[#allocation8 + $0x28] sm:$0xff]
    %v339 = vld [vmem:[#allocation8 + $0x30] sm:$0xff]
    %v340 = vld [vmem:[#allocation8 + $0x38] sm:$0xff]
    %v341 = vld [vmem:[#allocation8 + $0x40] sm:$0xff]
    %v342 = vld [vmem:[#allocation8 + $0x48] sm:$0xff]
    %v343 = vld [vmem:[#allocation8 + $0x50] sm:$0xff]
    %v344 = vld [vmem:[#allocation8 + $0x58] sm:$0xff]
    %v345 = vld [vmem:[#allocation8 + $0x60] sm:$0xff]
    %v346 = vld [vmem:[#allocation8 + $0x68] sm:$0xff]
    %v347 = vld [vmem:[#allocation8 + $0x70] sm:$0xff]
    %v348 = vld [vmem:[#allocation8 + $0x78] sm:$0xff]
    %v349 = vld [vmem:[#allocation8 + $0x80] sm:$0xff]
    %v350 = vld [vmem:[#allocation8 + $0x88] sm:$0xff]
    %v351 = vld [vmem:[#allocation8 + $0x90] sm:$0xff]
    %v352 = vld [vmem:[#allocation8 + $0x98] sm:$0xff]
    %v353 = vld [vmem:[#allocation8 + $0xa0] sm:$0xff]
    %v354 = vld [vmem:[#allocation8 + $0xa8] sm:$0xff]
    %v355 = vld [vmem:[#allocation8 + $0xb0] sm:$0xff]
    %v356 = vld [vmem:[#allocation8 + $0xb8] sm:$0xff]
    %v357 = vld [vmem:[#allocation8 + $0xc0] sm:$0xff]
    %v358 = vld [vmem:[#allocation8 + $0xc8] sm:$0xff]
    %v359 = vld [vmem:[#allocation8 + $0xd0] sm:$0xff]
    %v360 = vld [vmem:[#allocation8 + $0xd8] sm:$0xff]
    %v361 = vld [vmem:[#allocation8 + $0xe0] sm:$0xff]
    %v362 = vld [vmem:[#allocation8 + $0xe8] sm:$0xff]
    %v363 = vld [vmem:[#allocation8 + $0xf0] sm:$0xff]
    %v364 = vld [vmem:[#allocation8 + $0xf8] sm:$0xff]
    %v365 = vld [vmem:[%s6] sm:$0x1]
    %v367 = vlaneseq
    %v368 = vshrl.u32 %v367, 7
    %v369 = vsub.s32 0, %v368
    %v370 = vrot.slane %v365, %v369
    %372 = vmatprep.subr.mxu0 0.0
    %373 = vmatpush1.msra.mxu0 %v333
    %374 = vmatprep.subr.mxu0 0.0
    %375 = vmatpush1.msra.mxu0 %v334
    %376 = vmatprep.subr.mxu0 0.0
    %377 = vmatpush1.msra.mxu0 %v335
    %378 = vmatprep.subr.mxu0 0.0
    %379 = vmatpush1.msra.mxu0 %v336
    %380 = vmatprep.subr.mxu0 0.0
    %381 = vmatpush1.msra.mxu0 %v337
    %382 = vmatprep.subr.mxu0 0.0
    %383 = vmatpush1.msra.mxu0 %v338
    %384 = vmatprep.subr.mxu0 0.0
    %385 = vmatpush1.msra.mxu0 %v339
    %386 = vmatprep.subr.mxu0 0.0
    %387 = vmatpush1.msra.mxu0 %v340
    %388 = vmatprep.subr.mxu0 0.0
    %389 = vmatpush1.msra.mxu0 %v341
    %390 = vmatprep.subr.mxu0 0.0
    %391 = vmatpush1.msra.mxu0 %v342
    %392 = vmatprep.subr.mxu0 0.0
    %393 = vmatpush1.msra.mxu0 %v343
    %394 = vmatprep.subr.mxu0 0.0
    %395 = vmatpush1.msra.mxu0 %v344
    %396 = vmatprep.subr.mxu0 0.0
    %397 = vmatpush1.msra.mxu0 %v345
    %398 = vmatprep.subr.mxu0 0.0
    %399 = vmatpush1.msra.mxu0 %v346
    %400 = vmatprep.subr.mxu0 0.0
    %401 = vmatpush1.msra.mxu0 %v347
    %402 = vmatprep.subr.mxu0 0.0
    %403 = vmatpush1.msra.mxu0 %v348
    %404 = vmatprep.subr.mxu0 0.0
    %405 = vmatpush1.msra.mxu0 %v349
    %406 = vmatprep.subr.mxu0 0.0
    %407 = vmatpush1.msra.mxu0 %v350
    %408 = vmatprep.subr.mxu0 0.0
    %409 = vmatpush1.msra.mxu0 %v351
    %410 = vmatprep.subr.mxu0 0.0
    %411 = vmatpush1.msra.mxu0 %v352
    %412 = vmatprep.subr.mxu0 0.0
    %413 = vmatpush1.msra.mxu0 %v353
    %414 = vmatprep.subr.mxu0 0.0
    %415 = vmatpush1.msra.mxu0 %v354
    %416 = vmatprep.subr.mxu0 0.0
    %417 = vmatpush1.msra.mxu0 %v355
    %418 = vmatprep.subr.mxu0 0.0
    %419 = vmatpush1.msra.mxu0 %v356
    %420 = vmatprep.subr.mxu0 0.0
    %421 = vmatpush1.msra.mxu0 %v357
    %422 = vmatprep.subr.mxu0 0.0
    %423 = vmatpush1.msra.mxu0 %v358
    %424 = vmatprep.subr.mxu0 0.0
    %425 = vmatpush1.msra.mxu0 %v359
    %426 = vmatprep.subr.mxu0 0.0
    %427 = vmatpush1.msra.mxu0 %v360
    %428 = vmatprep.subr.mxu0 0.0
    %429 = vmatpush1.msra.mxu0 %v361
    %430 = vmatprep.subr.mxu0 0.0
    %431 = vmatpush1.msra.mxu0 %v362
    %432 = vmatprep.subr.mxu0 0.0
    %433 = vmatpush1.msra.mxu0 %v363
    %434 = vmatprep.subr.mxu0 0.0
    %435 = vmatpush1.msra.mxu0 %v364
    %436 = vmatprep.mubr.f32.mxu0 %v332
    %437 = vmatmul.mubr.f32.gmra.mrb[0].mxu0 %v331
    %v438 = vpop.f32.mrb[0].mxu0
    %v439 = vadd.f32 %v370, %v438
    %v440 = vpop.f32.mrb[0].mxu0
    %441 = vdwg.mxu0
    %v442 = vld [vmem:[%s7] sm:$0x1]
    %v444 = vlaneseq
    %v445 = vshrl.u32 %v444, 7
    %v446 = vsub.s32 0, %v445
    %v447 = vrot.slane %v442, %v446
    %v449 = vmax.f32 %v439, %v447
    %v450 = vld [vmem:[%s8] sm:$0x1]
    %v452 = vlaneseq
    %v453 = vshrl.u32 %v452, 7
    %v454 = vsub.s32 0, %v453
    %v455 = vrot.slane %v450, %v454
    %v457 = vmin.f32 %v449, %v455
    %458 = vst [vmem:[#allocation10] sm:$0xff] %v457
    // Predicated region
    $region54: #{tpu_custom_call.1} parent=1 // pred_check
      _
    $region55: #{tpu_custom_call.1} parent=1 // pred_check_branch
      %460 = sbr.rel (0) target = $region57
    $region56: #{tpu_custom_call.1} parent=1 // pred_region
      %s462 = ssub.s32 128, 128
      %463 = vsyncadd [#allocation4], %s462
      %s465 = sshll.u32 [#allocation10], 4
      %s466 = int_to_ptr.vmem [resolvable:$true] %s465
      %468 = dma.vmem_to_hbm [thread:$0]  %s466, 128, %s9, [#allocation4]
    $region57: #{tpu_custom_call.1} parent=1 // pred_fallthru
      _
    // Predicated region
    $region58: #{tpu_custom_call.1} parent=1 // pred_check
      _
    $region59: #{tpu_custom_call.1} parent=1 // pred_check_branch
      %470 = sbr.rel (0) target = $region61
    $region60: #{tpu_custom_call.1} parent=1 // pred_region
      %471 = dma.done [#allocation4], 128
    $region61: #{tpu_custom_call.1} parent=1 // pred_fallthru
      _
    %472 = vsyncpa [#allocation3], 1
    %473 = vsyncpa [#allocation6], 1
    %474 = vsyncpa [#allocation9], 1
    %475 = vsyncpa [#allocation4], 1

</llo_original>
